<compile_context>
chip_gen: v7x
topology: tpu7x:2x2x1
jax: 0.10.0
libtpu: 0.0.40
codegen_flags: <defaults>
</compile_context>

<pallas_src>
import functools

import jax
import jax.numpy as jnp
from jax import lax
from jax.experimental import pallas as pl
from jax.experimental.pallas import tpu as pltpu


NUM_BLOCKS = 3          # teacher and student must have the same number of blocks
NUM_FEAT = NUM_BLOCKS - 1
CHAN_T = 32             # teacher block width
CHAN_S = 16             # student block width (chan_t > chan_s -> real converters)
NUM_CLASSES = 10

MXU_DTYPE = jnp.bfloat16     # dot operands only; accumulation + epilogue stay f32
MAX_HW_TILE = 4096           # spatial (lane-axis) columns per grid step (review: 2048-8192)
MAX_LANES_PER_STEP = 8192    # cap on BBLK*THW lanes per step (keeps activations tiny vs VMEM)


# ----------------------------------------------------------------------------
# Fused Pallas kernel: whole SwapNet forward for one (batch-block, hw-tile) step
# ----------------------------------------------------------------------------
def _fused_forward_kernel(x_ref, emb_w_ref, emb_b_ref, slab_w_ref, slab_b_ref,
                          cls_w_ref, cls_b_ref, out_ref, acc_ref,
                          *, relu_flags, emb_relu, hw_total, bblk, thw):
    """Refs:
         x_ref      (BBLK, Cin, THW)   f32   streamed activation tile
         emb_w_ref  (Cmax, Cin)        bf16  embedder W^T (rows zero-padded)
         emb_b_ref  (Cmax, 1)          f32
         slab_w_ref (L, Cmax, Cmax)    bf16  packed chain-layer W^T slab
         slab_b_ref (L, Cmax, 1)       f32   packed bias slab
         cls_w_ref  (Cmax, NCLS)       f32   classifier weight (rows zero-padded)
         cls_b_ref  (1, NCLS)          f32
         out_ref    (BBLK, 1, NCLS)    f32   lane-dense logits
         acc_ref    (BBLK, Cmax, 1)    f32   GAP channel-sum accumulator (scratch)
    """
    j = pl.program_id(1)                     # spatial-tile index (reduction axis)

    # --- x streamed f32, cast to bf16 in-kernel (no extra wrapper HBM pass) ----
    if bblk == 1:
        x_in = x_ref[0].astype(MXU_DTYPE)                          # (Cin, THW)
    else:
        # Fold the batch block onto the lane axis: (Cin, BBLK*THW).  THW is a
        # multiple of 128, so each batch segment stays lane-aligned.
        x_in = jnp.concatenate([x_ref[b] for b in range(bblk)],
                               axis=-1).astype(MXU_DTYPE)

    # --- embedder: bf16 MXU dot, f32 accumulate + bias (+ ReLU) ----------------
    y = jnp.dot(emb_w_ref[...], x_in,
                preferred_element_type=jnp.float32) + emb_b_ref[...]
    act = jnp.maximum(y, 0.0) if emb_relu else y                   # (Cmax, N) f32

    # --- packed chain (blocks + converters): eager bf16 between layers ---------
    n_chain = len(relu_flags)
    for l in range(n_chain):
        lhs = act.astype(MXU_DTYPE)          # eager downcast; last layer stays f32
        y = jnp.dot(slab_w_ref[l], lhs,
                    preferred_element_type=jnp.float32) + slab_b_ref[l]
        act = jnp.maximum(y, 0.0) if relu_flags[l] else y
    # `act` (last chain layer) stays f32 for the GAP / classifier epilogue.

    # --- global-average-pool: per-batch segmented lane-sum, accumulated over j -
    @pl.when(j == 0)
    def _():
        acc_ref[...] = jnp.zeros_like(acc_ref)

    for b in range(bblk):
        seg = act if bblk == 1 else act[:, b * thw:(b + 1) * thw]   # lane-aligned
        acc_ref[b] = acc_ref[b] + jnp.sum(seg, axis=1, keepdims=True)

    # --- classifier fused into the finalize branch (lane-dense logits) ---------
    @pl.when(j == pl.num_programs(1) - 1)
    def _():
        inv_hw = 1.0 / hw_total
        for b in range(bblk):
            pooled = acc_ref[b] * inv_hw                            # (Cmax, 1) f32
            # Contract dim 0 of both operands -> (1, NCLS): classes on lanes.
            logits = lax.dot_general(
                pooled, cls_w_ref[...],
                dimension_numbers=(((0,), (0,)), ((), ())),
                preferred_element_type=jnp.float32) + cls_b_ref[...]
            out_ref[b] = logits.astype(out_ref.dtype)               # (1, NCLS)


def _pick_hw_tile(hw):
    """Largest multiple-of-128 tile (<= MAX_HW_TILE) dividing hw; else full hw."""
    if hw % 128 != 0 or hw <= MAX_HW_TILE:
        return hw
    t = (MAX_HW_TILE // 128) * 128
    while hw % t != 0:
        t -= 128
    return t


def _pick_bblk(batch, thw):
    """Largest batch block dividing `batch`, keeping >= 2 parallel grid steps
    (feeds both v7x TensorCores) and a bounded lane width per step."""
    best = 1
    for c in range(2, batch + 1):
        if batch % c == 0 and batch // c >= 2 and c * thw <= MAX_LANES_PER_STEP:
            best = c
    return best


def _pad2(a, rows, cols):
    """Zero-pad a 2-D array up to (rows, cols)."""
    out = jnp.zeros((rows, cols), a.dtype)
    return out.at[:a.shape[0], :a.shape[1]].set(a)


# ----------------------------------------------------------------------------
# Deterministic synthetic parameters (shapes implied by SwapNet.__init__)
# ----------------------------------------------------------------------------
def _init_linear(key, cin, cout, scale=0.1):
    kw, kb = jax.random.split(key)
    w = jax.random.normal(kw, (cin, cout), jnp.float32) * scale
    b = jax.random.normal(kb, (cout,), jnp.float32) * scale
    return {"w": w, "b": b}


def init_swapnet_params(key, in_chans):
    keys = iter(jax.random.split(key, 64))

    def make_net(width):
        return {
            "embedder": _init_linear(next(keys), in_chans, width),      # 1x1 conv
            "blocks": [_init_linear(next(keys), width, width)           # 1x1 conv + relu
                       for _ in range(NUM_BLOCKS)],
            "classifier": _init_linear(next(keys), width, NUM_CLASSES), # GAP + linear
        }

    return {
        "teacher": make_net(CHAN_T),
        "student": make_net(CHAN_S),
        # FeatureConverter(chan_t -> chan_s) and FeatureConverter(chan_s -> chan_t)
        "encoders": [_init_linear(next(keys), CHAN_T, CHAN_S) for _ in range(NUM_FEAT)],
        "decoders": [_init_linear(next(keys), CHAN_S, CHAN_T) for _ in range(NUM_FEAT)],
    }


def _route_layers(params, from_teachers):
    """Static per-route layer list (w, b, relu) + classifier params."""
    assert len(from_teachers) == NUM_BLOCKS
    layers = []
    emb = params["teacher" if from_teachers[0] else "student"]["embedder"]
    layers.append((emb["w"], emb["b"], True))
    for i in range(NUM_BLOCKS):
        is_teacher = from_teachers[i]
        blk = params["teacher" if is_teacher else "student"]["blocks"][i]
        layers.append((blk["w"], blk["b"], True))
        # converter only when routing flips between this block and the next
        if i < NUM_BLOCKS - 1 and from_teachers[i] != from_teachers[i + 1]:
            conv = params["encoders"][i] if is_teacher else params["decoders"][i]
            layers.append((conv["w"], conv["b"], False))
    cls = params["teacher" if from_teachers[-1] else "student"]["classifier"]
    return layers, cls


# ----------------------------------------------------------------------------
# SwapNet.forward: routing static in Python, entire hot path in ONE pallas_call
# ----------------------------------------------------------------------------
def swapnet_forward(params, x_nchw, from_teachers):
    B, Cin, H, W = x_nchw.shape
    HW = H * W
    THW = _pick_hw_tile(HW)
    BBLK = _pick_bblk(B, THW)
    n_hw = HW // THW
    n_bb = B // BBLK

    layers, cls = _route_layers(params, from_teachers)
    emb_layer, chain = layers[0], layers[1:]
    # Common padded channel width for the packed slab (zero padding is exact).
    cmax = max(max(w.shape[0], w.shape[1]) for w, _, _ in layers)

    # Lane-dense layout: NCHW -> (B, C, H*W); spatial axis on the 128 lanes.
    # Stays f32: the bf16 cast happens inside the kernel (no extra HBM pass).
    x = x_nchw.reshape(B, Cin, HW)

    emb_w, emb_b_raw, emb_relu = emb_layer
    emb_wT = _pad2(jnp.transpose(emb_w), cmax, Cin).astype(MXU_DTYPE)   # (Cmax, Cin)
    emb_b = _pad2(emb_b_raw.reshape(-1, 1), cmax, 1).astype(jnp.float32)

    # Packed chain slab: zero-padded W^T (Cmax, Cmax) + biases (Cmax, 1).
    slab_w = jnp.stack([_pad2(jnp.transpose(w), cmax, cmax)
                        for w, _, _ in chain]).astype(MXU_DTYPE)        # (L, Cmax, Cmax)
    slab_b = jnp.stack([_pad2(b.reshape(-1, 1), cmax, 1)
                        for _, b, _ in chain]).astype(jnp.float32)      # (L, Cmax, 1)
    relu_flags = tuple(bool(r) for _, _, r in chain)

    # Classifier: rows zero-padded to Cmax (padded pooled channels are exact zeros).
    cls_w = _pad2(cls["w"], cmax, NUM_CLASSES).astype(jnp.float32)      # (Cmax, NCLS)
    cls_b = cls["b"].reshape(1, -1).astype(jnp.float32)                 # (1, NCLS)

    kernel = functools.partial(
        _fused_forward_kernel,
        relu_flags=relu_flags,
        emb_relu=bool(emb_relu),
        hw_total=HW,
        bblk=BBLK,
        thw=THW,
    )

    out = pl.pallas_call(
        kernel,
        out_shape=jax.ShapeDtypeStruct((B, 1, NUM_CLASSES), jnp.float32),
        grid=(n_bb, n_hw),
        in_specs=[
            pl.BlockSpec((BBLK, Cin, THW), lambda i, j: (i, 0, j)),
            # Full-array, constant-index blocks: staged into VMEM once, resident.
            pl.BlockSpec(emb_wT.shape, lambda i, j: (0, 0)),
            pl.BlockSpec(emb_b.shape, lambda i, j: (0, 0)),
            pl.BlockSpec(slab_w.shape, lambda i, j: (0, 0, 0)),
            pl.BlockSpec(slab_b.shape, lambda i, j: (0, 0, 0)),
            pl.BlockSpec(cls_w.shape, lambda i, j: (0, 0)),
            pl.BlockSpec(cls_b.shape, lambda i, j: (0, 0)),
        ],
        out_specs=pl.BlockSpec((BBLK, 1, NUM_CLASSES), lambda i, j: (i, 0, 0)),
        scratch_shapes=[pltpu.VMEM((BBLK, cmax, 1), jnp.float32)],
        compiler_params=pltpu.CompilerParams(
            # batch-block axis parallel (uses both v7x TensorCores, >= 2 steps);
            # spatial GAP-reduction axis trailing and "arbitrary".
            dimension_semantics=("parallel", "arbitrary"),
            vmem_limit_bytes=32 * 1024 * 1024,
        ),
    )(x, emb_wT, emb_b, slab_w, slab_b, cls_w, cls_b)
    return out.reshape(B, NUM_CLASSES)


# Pure-JAX reference. `mxu_dtype` lets us mirror the kernel's bf16 dot operands.
def swapnet_forward_ref(params, x_nchw, from_teachers, mxu_dtype=jnp.float32):
    B, Cin, H, W = x_nchw.shape
    x = jnp.transpose(x_nchw, (0, 2, 3, 1)).reshape(B * H * W, Cin)
    layers, cls = _route_layers(params, from_teachers)
    for w, bias, relu in layers:
        y = jnp.dot(x.astype(mxu_dtype), w.astype(mxu_dtype),
                    preferred_element_type=jnp.float32) + bias
        x = jnp.maximum(y, 0.0) if relu else y
    pooled = jnp.mean(x.reshape(B, H * W, -1), axis=1)
    return pooled @ cls["w"] + cls["b"]


if __name__ == "__main__":
    key = jax.random.PRNGKey(0)
    k_param, k_x, k_x2, k_x3 = jax.random.split(key, 4)

    B, CIN, H, W = 2, 3, 16, 16
    params = init_swapnet_params(k_param, CIN)
    x = jax.random.normal(k_x, (B, CIN, H, W), jnp.float32)

    # Route 1: teacher embedder -> teacher block0 -> encoder0 -> student block1
    #          -> decoder1 -> teacher block2 -> teacher classifier
    # Route 2: all-student path (no converters)
    for from_teachers in ([True, False, True], [False, False, False]):
        logits = jax.block_until_ready(swapnet_forward(params, x, from_teachers))
        assert logits.shape == (B, NUM_CLASSES)
        ref_matched = swapnet_forward_ref(params, x, from_teachers, mxu_dtype=MXU_DTYPE)
        ref_f32 = swapnet_forward_ref(params, x, from_teachers, mxu_dtype=jnp.float32)
        assert jnp.allclose(logits, ref_matched, atol=1e-3, rtol=1e-3), "mismatch (matched dtype)"
        assert jnp.allclose(logits, ref_f32, atol=1e-2, rtol=5e-2), "mismatch vs f32 reference"

    # Larger spatial input exercises multi-tile GAP accumulation (HW=9216 -> 3 tiles of 3072).
    x_big = jax.random.normal(k_x2, (B, CIN, 96, 96), jnp.float32)
    logits_big = jax.block_until_ready(swapnet_forward(params, x_big, [True, True, False]))
    ref_big = swapnet_forward_ref(params, x_big, [True, True, False], mxu_dtype=MXU_DTYPE)
    assert jnp.allclose(logits_big, ref_big, atol=1e-3, rtol=1e-3), "mismatch (multi-tile GAP)"

    # Larger batch exercises batch folding (B=4 -> BBLK=2 per step, 2 parallel grid steps).
    x_b4 = jax.random.normal(k_x3, (4, CIN, H, W), jnp.float32)
    logits_b4 = jax.block_until_ready(swapnet_forward(params, x_b4, [False, True, True]))
    ref_b4 = swapnet_forward_ref(params, x_b4, [False, True, True], mxu_dtype=MXU_DTYPE)
    assert jnp.allclose(logits_b4, ref_b4, atol=1e-3, rtol=1e-3), "mismatch (batch folding)"

    print("KERNEL_OK")
</pallas_src>

<mosaic_0001>
module attributes {stable_mosaic.version = 11 : i64} {
  func.func @_fused_forward_kernel(%arg0: i32, %arg1: i32, %arg2: memref<1x3x256xf32, #tpu.memory_space<vmem>>, %arg3: memref<32x3xbf16, #tpu.memory_space<vmem>>, %arg4: memref<32x1xf32, #tpu.memory_space<vmem>>, %arg5: memref<5x32x32xbf16, #tpu.memory_space<vmem>>, %arg6: memref<5x32x1xf32, #tpu.memory_space<vmem>>, %arg7: memref<32x10xf32, #tpu.memory_space<vmem>>, %arg8: memref<1x10xf32, #tpu.memory_space<vmem>>, %arg9: memref<1x1x10xf32, #tpu.memory_space<vmem>>, %arg10: memref<1x32x1xf32, #tpu.memory_space<vmem>>) attributes {dimension_semantics = [#tpu.dimension_semantics<parallel>, #tpu.dimension_semantics<arbitrary>], iteration_bounds = array<i64: 2, 1>, scalar_prefetch = 0 : i64, scratch_operands = 1 : i64, tpu.core_type = #tpu.core_type<tc>, window_params = [{transform_indices = @transform_0, window_bounds = array<i64: 1, 3, 256>}, {pipeline_mode = #tpu.pipeline_mode<synchronous>, transform_indices = @transform_1, window_bounds = array<i64: 32, 3>}, {pipeline_mode = #tpu.pipeline_mode<synchronous>, transform_indices = @transform_2, window_bounds = array<i64: 32, 1>}, {pipeline_mode = #tpu.pipeline_mode<synchronous>, transform_indices = @transform_3, window_bounds = array<i64: 5, 32, 32>}, {pipeline_mode = #tpu.pipeline_mode<synchronous>, transform_indices = @transform_4, window_bounds = array<i64: 5, 32, 1>}, {pipeline_mode = #tpu.pipeline_mode<synchronous>, transform_indices = @transform_5, window_bounds = array<i64: 32, 10>}, {pipeline_mode = #tpu.pipeline_mode<synchronous>, transform_indices = @transform_6, window_bounds = array<i64: 1, 10>}, {transform_indices = @transform_7, window_bounds = array<i64: 1, 1, 10>}]} {
    %c0 = arith.constant 0 : index
    %c0_0 = arith.constant 0 : index
    %c0_1 = arith.constant 0 : index
    %0 = vector.load %arg2[%c0, %c0_0, %c0_1] : memref<1x3x256xf32, #tpu.memory_space<vmem>>, vector<1x3x256xf32>
    %1 = vector.shape_cast %0 : vector<1x3x256xf32> to vector<3x256xf32>
    %2 = arith.truncf %1 : vector<3x256xf32> to vector<3x256xbf16>
    %c0_2 = arith.constant 0 : index
    %c0_3 = arith.constant 0 : index
    %3 = vector.load %arg3[%c0_2, %c0_3] : memref<32x3xbf16, #tpu.memory_space<vmem>>, vector<32x3xbf16>
    %cst = arith.constant dense<0.000000e+00> : vector<32x256xf32>
    %4 = tpu.matmul %3, %2, %cst {dimension_numbers = #tpu.dot_dimension_numbers<[1], [0], [0], [1], [0, 0, 1, 1], [], []>} : vector<32x3xbf16>, vector<3x256xbf16>, vector<32x256xf32> -> vector<32x256xf32>
    %c0_4 = arith.constant 0 : index
    %c0_5 = arith.constant 0 : index
    %5 = vector.load %arg4[%c0_4, %c0_5] : memref<32x1xf32, #tpu.memory_space<vmem>>, vector<32x1xf32>
    %6 = vector.broadcast %5 : vector<32x1xf32> to vector<32x256xf32>
    %7 = arith.addf %4, %6 : vector<32x256xf32>
    %cst_6 = arith.constant 0.000000e+00 : f32
    %8 = vector.broadcast %cst_6 : f32 to vector<32x256xf32>
    %9 = arith.maximumf %7, %8 : vector<32x256xf32>
    %10 = arith.truncf %9 : vector<32x256xf32> to vector<32x256xbf16>
    %c0_7 = arith.constant 0 : index
    %c0_8 = arith.constant 0 : index
    %c0_9 = arith.constant 0 : index
    %11 = vector.load %arg5[%c0_7, %c0_8, %c0_9] : memref<5x32x32xbf16, #tpu.memory_space<vmem>>, vector<1x32x32xbf16>
    %12 = vector.shape_cast %11 : vector<1x32x32xbf16> to vector<32x32xbf16>
    %cst_10 = arith.constant dense<0.000000e+00> : vector<32x256xf32>
    %13 = tpu.matmul %12, %10, %cst_10 {dimension_numbers = #tpu.dot_dimension_numbers<[1], [0], [0], [1], [0, 0, 1, 1], [], []>} : vector<32x32xbf16>, vector<32x256xbf16>, vector<32x256xf32> -> vector<32x256xf32>
    %c0_11 = arith.constant 0 : index
    %c0_12 = arith.constant 0 : index
    %c0_13 = arith.constant 0 : index
    %14 = vector.load %arg6[%c0_11, %c0_12, %c0_13] : memref<5x32x1xf32, #tpu.memory_space<vmem>>, vector<1x32x1xf32>
    %15 = vector.shape_cast %14 : vector<1x32x1xf32> to vector<32x1xf32>
    %16 = vector.broadcast %15 : vector<32x1xf32> to vector<32x256xf32>
    %17 = arith.addf %13, %16 : vector<32x256xf32>
    %cst_14 = arith.constant 0.000000e+00 : f32
    %18 = vector.broadcast %cst_14 : f32 to vector<32x256xf32>
    %19 = arith.maximumf %17, %18 : vector<32x256xf32>
    %20 = arith.truncf %19 : vector<32x256xf32> to vector<32x256xbf16>
    %c1 = arith.constant 1 : index
    %c0_15 = arith.constant 0 : index
    %c0_16 = arith.constant 0 : index
    %21 = vector.load %arg5[%c1, %c0_15, %c0_16] : memref<5x32x32xbf16, #tpu.memory_space<vmem>>, vector<1x32x32xbf16>
    %22 = vector.shape_cast %21 : vector<1x32x32xbf16> to vector<32x32xbf16>
    %cst_17 = arith.constant dense<0.000000e+00> : vector<32x256xf32>
    %23 = tpu.matmul %22, %20, %cst_17 {dimension_numbers = #tpu.dot_dimension_numbers<[1], [0], [0], [1], [0, 0, 1, 1], [], []>} : vector<32x32xbf16>, vector<32x256xbf16>, vector<32x256xf32> -> vector<32x256xf32>
    %c1_18 = arith.constant 1 : index
    %c0_19 = arith.constant 0 : index
    %c0_20 = arith.constant 0 : index
    %24 = vector.load %arg6[%c1_18, %c0_19, %c0_20] : memref<5x32x1xf32, #tpu.memory_space<vmem>>, vector<1x32x1xf32>
    %25 = vector.shape_cast %24 : vector<1x32x1xf32> to vector<32x1xf32>
    %26 = vector.broadcast %25 : vector<32x1xf32> to vector<32x256xf32>
    %27 = arith.addf %23, %26 : vector<32x256xf32>
    %28 = arith.truncf %27 : vector<32x256xf32> to vector<32x256xbf16>
    %c2 = arith.constant 2 : index
    %c0_21 = arith.constant 0 : index
    %c0_22 = arith.constant 0 : index
    %29 = vector.load %arg5[%c2, %c0_21, %c0_22] : memref<5x32x32xbf16, #tpu.memory_space<vmem>>, vector<1x32x32xbf16>
    %30 = vector.shape_cast %29 : vector<1x32x32xbf16> to vector<32x32xbf16>
    %cst_23 = arith.constant dense<0.000000e+00> : vector<32x256xf32>
    %31 = tpu.matmul %30, %28, %cst_23 {dimension_numbers = #tpu.dot_dimension_numbers<[1], [0], [0], [1], [0, 0, 1, 1], [], []>} : vector<32x32xbf16>, vector<32x256xbf16>, vector<32x256xf32> -> vector<32x256xf32>
    %c2_24 = arith.constant 2 : index
    %c0_25 = arith.constant 0 : index
    %c0_26 = arith.constant 0 : index
    %32 = vector.load %arg6[%c2_24, %c0_25, %c0_26] : memref<5x32x1xf32, #tpu.memory_space<vmem>>, vector<1x32x1xf32>
    %33 = vector.shape_cast %32 : vector<1x32x1xf32> to vector<32x1xf32>
    %34 = vector.broadcast %33 : vector<32x1xf32> to vector<32x256xf32>
    %35 = arith.addf %31, %34 : vector<32x256xf32>
    %cst_27 = arith.constant 0.000000e+00 : f32
    %36 = vector.broadcast %cst_27 : f32 to vector<32x256xf32>
    %37 = arith.maximumf %35, %36 : vector<32x256xf32>
    %38 = arith.truncf %37 : vector<32x256xf32> to vector<32x256xbf16>
    %c3 = arith.constant 3 : index
    %c0_28 = arith.constant 0 : index
    %c0_29 = arith.constant 0 : index
    %39 = vector.load %arg5[%c3, %c0_28, %c0_29] : memref<5x32x32xbf16, #tpu.memory_space<vmem>>, vector<1x32x32xbf16>
    %40 = vector.shape_cast %39 : vector<1x32x32xbf16> to vector<32x32xbf16>
    %cst_30 = arith.constant dense<0.000000e+00> : vector<32x256xf32>
    %41 = tpu.matmul %40, %38, %cst_30 {dimension_numbers = #tpu.dot_dimension_numbers<[1], [0], [0], [1], [0, 0, 1, 1], [], []>} : vector<32x32xbf16>, vector<32x256xbf16>, vector<32x256xf32> -> vector<32x256xf32>
    %c3_31 = arith.constant 3 : index
    %c0_32 = arith.constant 0 : index
    %c0_33 = arith.constant 0 : index
    %42 = vector.load %arg6[%c3_31, %c0_32, %c0_33] : memref<5x32x1xf32, #tpu.memory_space<vmem>>, vector<1x32x1xf32>
    %43 = vector.shape_cast %42 : vector<1x32x1xf32> to vector<32x1xf32>
    %44 = vector.broadcast %43 : vector<32x1xf32> to vector<32x256xf32>
    %45 = arith.addf %41, %44 : vector<32x256xf32>
    %46 = arith.truncf %45 : vector<32x256xf32> to vector<32x256xbf16>
    %c4 = arith.constant 4 : index
    %c0_34 = arith.constant 0 : index
    %c0_35 = arith.constant 0 : index
    %47 = vector.load %arg5[%c4, %c0_34, %c0_35] : memref<5x32x32xbf16, #tpu.memory_space<vmem>>, vector<1x32x32xbf16>
    %48 = vector.shape_cast %47 : vector<1x32x32xbf16> to vector<32x32xbf16>
    %cst_36 = arith.constant dense<0.000000e+00> : vector<32x256xf32>
    %49 = tpu.matmul %48, %46, %cst_36 {dimension_numbers = #tpu.dot_dimension_numbers<[1], [0], [0], [1], [0, 0, 1, 1], [], []>} : vector<32x32xbf16>, vector<32x256xbf16>, vector<32x256xf32> -> vector<32x256xf32>
    %c4_37 = arith.constant 4 : index
    %c0_38 = arith.constant 0 : index
    %c0_39 = arith.constant 0 : index
    %50 = vector.load %arg6[%c4_37, %c0_38, %c0_39] : memref<5x32x1xf32, #tpu.memory_space<vmem>>, vector<1x32x1xf32>
    %51 = vector.shape_cast %50 : vector<1x32x1xf32> to vector<32x1xf32>
    %52 = vector.broadcast %51 : vector<32x1xf32> to vector<32x256xf32>
    %53 = arith.addf %49, %52 : vector<32x256xf32>
    %cst_40 = arith.constant 0.000000e+00 : f32
    %54 = vector.broadcast %cst_40 : f32 to vector<32x256xf32>
    %55 = arith.maximumf %53, %54 : vector<32x256xf32>
    %c0_i32 = arith.constant 0 : i32
    %56 = arith.cmpi eq, %arg1, %c0_i32 : i32
    %57 = arith.extui %56 : i1 to i32
    %c0_i32_41 = arith.constant 0 : i32
    %58 = arith.cmpi ne, %57, %c0_i32_41 : i32
    scf.if %58 {
      %cst_51 = arith.constant 0.000000e+00 : f32
      %70 = vector.broadcast %cst_51 : f32 to vector<1x32x1xf32>
      %c0_52 = arith.constant 0 : index
      %c0_53 = arith.constant 0 : index
      %c0_54 = arith.constant 0 : index
      %71 = vector.load %arg10[%c0_52, %c0_53, %c0_54] : memref<1x32x1xf32, #tpu.memory_space<vmem>>, vector<1x32x1xf32>
      tpu.vector_store %arg10[%c0_52, %c0_53, %c0_54], %70 {strides = array<i32>} : memref<1x32x1xf32, #tpu.memory_space<vmem>>, vector<1x32x1xf32>,
    } else {
    }
    %c0_42 = arith.constant 0 : index
    %c0_43 = arith.constant 0 : index
    %c0_44 = arith.constant 0 : index
    %59 = vector.load %arg10[%c0_42, %c0_43, %c0_44] : memref<1x32x1xf32, #tpu.memory_space<vmem>>, vector<1x32x1xf32>
    %60 = vector.shape_cast %59 : vector<1x32x1xf32> to vector<32x1xf32>
    %cst_45 = arith.constant dense<0.000000e+00> : vector<32xf32>
    %61 = vector.multi_reduction <add>, %55, %cst_45 [1] : vector<32x256xf32> to vector<32xf32>
    %62 = vector.shape_cast %61 : vector<32xf32> to vector<32x1xf32>
    %63 = arith.addf %60, %62 : vector<32x1xf32>
    %c0_46 = arith.constant 0 : index
    %c0_47 = arith.constant 0 : index
    %c0_48 = arith.constant 0 : index
    %64 = vector.load %arg10[%c0_46, %c0_47, %c0_48] : memref<1x32x1xf32, #tpu.memory_space<vmem>>, vector<1x32x1xf32>
    %65 = vector.shape_cast %64 : vector<1x32x1xf32> to vector<32x1xf32>
    %66 = vector.shape_cast %63 : vector<32x1xf32> to vector<1x32x1xf32>
    tpu.vector_store %arg10[%c0_46, %c0_47, %c0_48], %66 {strides = array<i32>} : memref<1x32x1xf32, #tpu.memory_space<vmem>>, vector<1x32x1xf32>,
    %c0_i32_49 = arith.constant 0 : i32
    %67 = arith.cmpi eq, %arg1, %c0_i32_49 : i32
    %68 = arith.extui %67 : i1 to i32
    %c0_i32_50 = arith.constant 0 : i32
    %69 = arith.cmpi ne, %68, %c0_i32_50 : i32
    scf.if %69 {
      %c0_51 = arith.constant 0 : index
      %c0_52 = arith.constant 0 : index
      %c0_53 = arith.constant 0 : index
      %70 = vector.load %arg10[%c0_51, %c0_52, %c0_53] : memref<1x32x1xf32, #tpu.memory_space<vmem>>, vector<1x32x1xf32>
      %71 = vector.shape_cast %70 : vector<1x32x1xf32> to vector<32x1xf32>
      %cst_54 = arith.constant 3.906250e-03 : f32
      %72 = vector.broadcast %cst_54 : f32 to vector<32x1xf32>
      %73 = arith.mulf %71, %72 : vector<32x1xf32>
      %c0_55 = arith.constant 0 : index
      %c0_56 = arith.constant 0 : index
      %74 = vector.load %arg7[%c0_55, %c0_56] : memref<32x10xf32, #tpu.memory_space<vmem>>, vector<32x10xf32>
      %cst_57 = arith.constant dense<0.000000e+00> : vector<1x10xf32>
      %75 = tpu.matmul %73, %74, %cst_57 {dimension_numbers = #tpu.dot_dimension_numbers<[0], [0], [1], [1], [0, 1, 1, 1], [], []>} : vector<32x1xf32>, vector<32x10xf32>, vector<1x10xf32> -> vector<1x10xf32>
      %c0_58 = arith.constant 0 : index
      %c0_59 = arith.constant 0 : index
      %76 = vector.load %arg8[%c0_58, %c0_59] : memref<1x10xf32, #tpu.memory_space<vmem>>, vector<1x10xf32>
      %77 = arith.addf %75, %76 : vector<1x10xf32>
      %c0_60 = arith.constant 0 : index
      %c0_61 = arith.constant 0 : index
      %c0_62 = arith.constant 0 : index
      %78 = vector.load %arg9[%c0_60, %c0_61, %c0_62] : memref<1x1x10xf32, #tpu.memory_space<vmem>>, vector<1x1x10xf32>
      %79 = vector.shape_cast %78 : vector<1x1x10xf32> to vector<1x10xf32>
      %80 = vector.shape_cast %77 : vector<1x10xf32> to vector<1x1x10xf32>
      tpu.vector_store %arg9[%c0_60, %c0_61, %c0_62], %80 {strides = array<i32>} : memref<1x1x10xf32, #tpu.memory_space<vmem>>, vector<1x1x10xf32>,
    } else {
    }
    return
  }
  func.func @transform_0(%arg0: i32, %arg1: i32) -> (i32, i32, i32) {
    %c0_i32 = arith.constant 0 : i32
    %c0_i32_0 = arith.constant 0 : i32
    return %arg0, %c0_i32, %arg1 : i32, i32, i32
  }
  func.func @transform_1(%arg0: i32, %arg1: i32) -> (i32, i32) {
    %c0_i32 = arith.constant 0 : i32
    %c0_i32_0 = arith.constant 0 : i32
    %c0_i32_1 = arith.constant 0 : i32
    return %c0_i32, %c0_i32_0 : i32, i32
  }
  func.func @transform_2(%arg0: i32, %arg1: i32) -> (i32, i32) {
    %c0_i32 = arith.constant 0 : i32
    %c0_i32_0 = arith.constant 0 : i32
    %c0_i32_1 = arith.constant 0 : i32
    return %c0_i32, %c0_i32_0 : i32, i32
  }
  func.func @transform_3(%arg0: i32, %arg1: i32) -> (i32, i32, i32) {
    %c0_i32 = arith.constant 0 : i32
    %c0_i32_0 = arith.constant 0 : i32
    %c0_i32_1 = arith.constant 0 : i32
    %c0_i32_2 = arith.constant 0 : i32
    return %c0_i32, %c0_i32_0, %c0_i32_1 : i32, i32, i32
  }
  func.func @transform_4(%arg0: i32, %arg1: i32) -> (i32, i32, i32) {
    %c0_i32 = arith.constant 0 : i32
    %c0_i32_0 = arith.constant 0 : i32
    %c0_i32_1 = arith.constant 0 : i32
    %c0_i32_2 = arith.constant 0 : i32
    return %c0_i32, %c0_i32_0, %c0_i32_1 : i32, i32, i32
  }
  func.func @transform_5(%arg0: i32, %arg1: i32) -> (i32, i32) {
    %c0_i32 = arith.constant 0 : i32
    %c0_i32_0 = arith.constant 0 : i32
    %c0_i32_1 = arith.constant 0 : i32
    return %c0_i32, %c0_i32_0 : i32, i32
  }
  func.func @transform_6(%arg0: i32, %arg1: i32) -> (i32, i32) {
    %c0_i32 = arith.constant 0 : i32
    %c0_i32_0 = arith.constant 0 : i32
    %c0_i32_1 = arith.constant 0 : i32
    return %c0_i32, %c0_i32_0 : i32, i32
  }
  func.func @transform_7(%arg0: i32, %arg1: i32) -> (i32, i32, i32) {
    %c0_i32 = arith.constant 0 : i32
    %c0_i32_0 = arith.constant 0 : i32
    %c0_i32_1 = arith.constant 0 : i32
    return %arg0, %c0_i32, %c0_i32_0 : i32, i32, i32
  }
}

</mosaic_0001>

<llo_original>
// kernel: tpu_custom_call.1
$region0: #{tpu_custom_call.1}
  #allocation0 [shape = 'u32[]', space=smem, size = 0x4, offset = 0x4, fixed_abs, tag = 'smem constant byte address 0x4 - core index']
  #allocation1 [shape = 'u32[144,128]{1,0:T(1,128)}', space=vmem, size = 0x12000, scoped, tag = 'internal scratch']
  #allocation2 [shape = 'f32[1,32,1]{2,1,0:T(8,128)}', space=vmem, size = 0x4000, scoped, tag = 'scratch operand']
  %s0 = inlined_call_operand.vmem [shape: f32[2,3,256], index: 0, kind: input, shape index: {}]
  %s1 = inlined_call_operand.vmem [shape: bf16[32,3], index: 1, kind: input, shape index: {}]
  %s2 = inlined_call_operand.vmem [shape: f32[32,1], index: 2, kind: input, shape index: {}]
  %s3 = inlined_call_operand.vmem [shape: bf16[5,32,32], index: 3, kind: input, shape index: {}]
  %s4 = inlined_call_operand.vmem [shape: f32[5,32,1], index: 4, kind: input, shape index: {}]
  %s5 = inlined_call_operand.vmem [shape: f32[32,10], index: 5, kind: input, shape index: {}]
  %s6 = inlined_call_operand.vmem [shape: f32[1,10], index: 6, kind: input, shape index: {}]
  %s7 = inlined_call_operand.hbm [shape: f32[2,1,10], index: 7, kind: output, shape index: {}]
  %s8 = sld [smem:[#allocation0]]
  $region69: #{tpu_custom_call.1} parent=0
    _
  %s10 = ssub.s32 1, %s8
  %s11 = scalar_select 0, %s10, %s8
  $region1: #{tpu_custom_call.1} parent=0
    #allocation3 [shape = 'u8[1024]{0}', space=vmem, size = 0x400, scoped, tag = 'output window, operand 0']
    #allocation4 [shape = 's32[2]{0}', space=sflag, size = 0x8, scoped, tag = 'scoped memory for tpu_custom_call.1']
    %12 = vsyncpa [#allocation4], 0
    %s13 = scalar_lea.sflag [#allocation4], 1
    %14 = vsyncpa %s13, 0
    loop: start=0, step=1, limit=4
    $region2: #{tpu_custom_call.1} parent=1 // loop_pre_header
      _
    $region3: #{tpu_custom_call.1} parent=1 // loop_header
      %s16 = sphi 0, %s20
      %p17 = scmp.ge.s32.totalorder %s16, 4
      %s23 = sphi 0, %s35
      %s24 = sphi 0, %s31
      %s25 = sphi 0, %s23
      %s26 = sphi 0, %s24
      %s27 = sphi 0, %s25
      %s28 = sphi 0, %s26
      %s40 = sphi 0, %s42
      %s43 = sphi 0, %s40
      %s44 = sphi 0, %s43
      %s60 = sphi 0, %s44
      %s64 = sphi 0, %s64
      %s66 = sphi 0, %s64
      %s67 = sphi 0, %s66
      %s81 = sphi 0, %s67
      %s85 = sphi 0, %s85
      %s87 = sphi 0, %s85
      %s88 = sphi 0, %s87
      %s102 = sphi 0, %s88
      %s106 = sphi 0, %s106
      %s108 = sphi 0, %s106
      %s109 = sphi 0, %s108
      %s123 = sphi 0, %s109
      %s127 = sphi 0, %s127
      %s129 = sphi 0, %s127
      %s130 = sphi 0, %s129
      %s144 = sphi 0, %s130
      %s148 = sphi 0, %s148
      %s150 = sphi 0, %s148
      %s151 = sphi 0, %s150
      %s165 = sphi 0, %s151
      %s169 = sphi 0, %s169
      %s171 = sphi 0, %s169
      %s172 = sphi 0, %s171
      %s186 = sphi 0, %s172
      %s192 = sphi 0, %s194
      %s195 = sphi 0, %s192
      %s196 = sphi 0, %s195
      %s212 = sphi 0, %s196
    $region4: #{tpu_custom_call.1} parent=1 // loop_header_branch
      %19 = sbr.rel (%p17) target = $region8
    $region5: #{tpu_custom_call.1} parent=1 // loop_body
      %s21 = ssub.s32 %s16, 1
      %s22 = ssub.s32 %s16, 2
      %s29 = sadd.s32 1, %s24
      %p30 = scmp.ge.s32.totalorder %s29, 1
      %s31 = scalar_select %p30, 0, %s29
      %s32 = sadd.s32 1, %s23
      %s33 = scalar_select %p30, %s32, %s23
      %p34 = scmp.ge.s32.totalorder %s33, 2
      %s35 = scalar_select %p34, 0, %s33
      %s36 = ssub.s32 %s23, %s35
      %s37 = ssub.s32 %s24, %s31
      %s38 = sor.u32 %s36, %s37
      %p39 = scmp.eq.s32.totalorder %s38, 0
      %s41 = sadd.s32 %s40, 1
      %s42 = scalar_select %p39, %s40, %s41
      %p45 = pneg %p39
      %p46 = scmp.eq.s32.totalorder %s16, 1
      %p47 = por %p45, %p46
      %p48 = scmp.ne.s32.totalorder %s40, %s43
      %p49 = scmp.eq.s32.totalorder %s16, 0
      %p50 = por %p48, %p49
      %p51 = scmp.ne.s32.totalorder %s40, %s43
      %p52 = scmp.eq.s32.totalorder %s21, 1
      %p53 = por %p51, %p52
      %p54 = scmp.ne.s32.totalorder %s43, %s44
      %p55 = scmp.eq.s32.totalorder %s21, 0
      %p56 = por %p54, %p55
      %p57 = scmp.ne.s32.totalorder %s43, %s44
      %p58 = scmp.eq.s32.totalorder %s22, 1
      %p59 = por %p57, %p58
      %p61 = scmp.ne.s32.totalorder %s44, %s60
      %p62 = scmp.eq.s32.totalorder %s22, 0
      %p63 = por %p61, %p62
      %s65 = sadd.s32 %s64, 1
      %p68 = scmp.eq.s32.totalorder %s16, 1
      %p69 = scmp.ne.s32.totalorder %s64, %s66
      %p70 = scmp.eq.s32.totalorder %s16, 0
      %p71 = por %p69, %p70
      %p72 = scmp.ne.s32.totalorder %s64, %s66
      %p73 = scmp.eq.s32.totalorder %s21, 1
      %p74 = por %p72, %p73
      %p75 = scmp.ne.s32.totalorder %s66, %s67
      %p76 = scmp.eq.s32.totalorder %s21, 0
      %p77 = por %p75, %p76
      %p78 = scmp.ne.s32.totalorder %s66, %s67
      %p79 = scmp.eq.s32.totalorder %s22, 1
      %p80 = por %p78, %p79
      %p82 = scmp.ne.s32.totalorder %s67, %s81
      %p83 = scmp.eq.s32.totalorder %s22, 0
      %p84 = por %p82, %p83
      %s86 = sadd.s32 %s85, 1
      %p89 = scmp.eq.s32.totalorder %s16, 1
      %p90 = scmp.ne.s32.totalorder %s85, %s87
      %p91 = scmp.eq.s32.totalorder %s16, 0
      %p92 = por %p90, %p91
      %p93 = scmp.ne.s32.totalorder %s85, %s87
      %p94 = scmp.eq.s32.totalorder %s21, 1
      %p95 = por %p93, %p94
      %p96 = scmp.ne.s32.totalorder %s87, %s88
      %p97 = scmp.eq.s32.totalorder %s21, 0
      %p98 = por %p96, %p97
      %p99 = scmp.ne.s32.totalorder %s87, %s88
      %p100 = scmp.eq.s32.totalorder %s22, 1
      %p101 = por %p99, %p100
      %p103 = scmp.ne.s32.totalorder %s88, %s102
      %p104 = scmp.eq.s32.totalorder %s22, 0
      %p105 = por %p103, %p104
      %s107 = sadd.s32 %s106, 1
      %p110 = scmp.eq.s32.totalorder %s16, 1
      %p111 = scmp.ne.s32.totalorder %s106, %s108
      %p112 = scmp.eq.s32.totalorder %s16, 0
      %p113 = por %p111, %p112
      %p114 = scmp.ne.s32.totalorder %s106, %s108
      %p115 = scmp.eq.s32.totalorder %s21, 1
      %p116 = por %p114, %p115
      %p117 = scmp.ne.s32.totalorder %s108, %s109
      %p118 = scmp.eq.s32.totalorder %s21, 0
      %p119 = por %p117, %p118
      %p120 = scmp.ne.s32.totalorder %s108, %s109
      %p121 = scmp.eq.s32.totalorder %s22, 1
      %p122 = por %p120, %p121
      %p124 = scmp.ne.s32.totalorder %s109, %s123
      %p125 = scmp.eq.s32.totalorder %s22, 0
      %p126 = por %p124, %p125
      %s128 = sadd.s32 %s127, 1
      %p131 = scmp.eq.s32.totalorder %s16, 1
      %p132 = scmp.ne.s32.totalorder %s127, %s129
      %p133 = scmp.eq.s32.totalorder %s16, 0
      %p134 = por %p132, %p133
      %p135 = scmp.ne.s32.totalorder %s127, %s129
      %p136 = scmp.eq.s32.totalorder %s21, 1
      %p137 = por %p135, %p136
      %p138 = scmp.ne.s32.totalorder %s129, %s130
      %p139 = scmp.eq.s32.totalorder %s21, 0
      %p140 = por %p138, %p139
      %p141 = scmp.ne.s32.totalorder %s129, %s130
      %p142 = scmp.eq.s32.totalorder %s22, 1
      %p143 = por %p141, %p142
      %p145 = scmp.ne.s32.totalorder %s130, %s144
      %p146 = scmp.eq.s32.totalorder %s22, 0
      %p147 = por %p145, %p146
      %s149 = sadd.s32 %s148, 1
      %p152 = scmp.eq.s32.totalorder %s16, 1
      %p153 = scmp.ne.s32.totalorder %s148, %s150
      %p154 = scmp.eq.s32.totalorder %s16, 0
      %p155 = por %p153, %p154
      %p156 = scmp.ne.s32.totalorder %s148, %s150
      %p157 = scmp.eq.s32.totalorder %s21, 1
      %p158 = por %p156, %p157
      %p159 = scmp.ne.s32.totalorder %s150, %s151
      %p160 = scmp.eq.s32.totalorder %s21, 0
      %p161 = por %p159, %p160
      %p162 = scmp.ne.s32.totalorder %s150, %s151
      %p163 = scmp.eq.s32.totalorder %s22, 1
      %p164 = por %p162, %p163
      %p166 = scmp.ne.s32.totalorder %s151, %s165
      %p167 = scmp.eq.s32.totalorder %s22, 0
      %p168 = por %p166, %p167
      %s170 = sadd.s32 %s169, 1
      %p173 = scmp.eq.s32.totalorder %s16, 1
      %p174 = scmp.ne.s32.totalorder %s169, %s171
      %p175 = scmp.eq.s32.totalorder %s16, 0
      %p176 = por %p174, %p175
      %p177 = scmp.ne.s32.totalorder %s169, %s171
      %p178 = scmp.eq.s32.totalorder %s21, 1
      %p179 = por %p177, %p178
      %p180 = scmp.ne.s32.totalorder %s171, %s172
      %p181 = scmp.eq.s32.totalorder %s21, 0
      %p182 = por %p180, %p181
      %p183 = scmp.ne.s32.totalorder %s171, %s172
      %p184 = scmp.eq.s32.totalorder %s22, 1
      %p185 = por %p183, %p184
      %p187 = scmp.ne.s32.totalorder %s172, %s186
      %p188 = scmp.eq.s32.totalorder %s22, 0
      %p189 = por %p187, %p188
      %s190 = ssub.s32 %s23, %s35
      %p191 = scmp.eq.s32.totalorder %s190, 0
      %s193 = sadd.s32 %s192, 1
      %s194 = scalar_select %p191, %s192, %s193
      %p197 = pneg %p191
      %p198 = scmp.eq.s32.totalorder %s16, 1
      %p199 = por %p197, %p198
      %p200 = scmp.ne.s32.totalorder %s192, %s195
      %p201 = scmp.eq.s32.totalorder %s16, 0
      %p202 = por %p200, %p201
      %p203 = scmp.ne.s32.totalorder %s192, %s195
      %p204 = scmp.eq.s32.totalorder %s21, 1
      %p205 = por %p203, %p204
      %p206 = scmp.ne.s32.totalorder %s195, %s196
      %p207 = scmp.eq.s32.totalorder %s21, 0
      %p208 = por %p206, %p207
      %p209 = scmp.ne.s32.totalorder %s195, %s196
      %p210 = scmp.eq.s32.totalorder %s22, 1
      %p211 = por %p209, %p210
      %p213 = scmp.ne.s32.totalorder %s196, %s212
      %p214 = scmp.eq.s32.totalorder %s22, 0
      %p215 = por %p213, %p214
      %p216 = scmp.le.s32.totalorder 1, %s16
      %p217 = scmp.lt.s32.totalorder %s16, 3
      %p218 = pnand %p216, %p217
      %p219 = pneg %p218
      // Predicated region
      $region9: #{tpu_custom_call.1} parent=5 // pred_check
        _
      $region10: #{tpu_custom_call.1} parent=5 // pred_check_branch
        %221 = sbr.rel (%p218) target = $region12
      $region11: #{tpu_custom_call.1} parent=5 // pred_region
        %s222 = ssub.s32 %s16, 1
        // Predicated region
        $region13: #{tpu_custom_call.1} parent=11 // pred_check
          %p223 = pneg %p77
        $region14: #{tpu_custom_call.1} parent=11 // pred_check_branch
          %225 = sbr.rel (%p223) target = $region16
        $region15: #{tpu_custom_call.1} parent=11 // pred_region
          _
        $region16: #{tpu_custom_call.1} parent=11 // pred_fallthru
          _
        // Predicated region
        $region17: #{tpu_custom_call.1} parent=11 // pred_check
          %p226 = pneg %p98
        $region18: #{tpu_custom_call.1} parent=11 // pred_check_branch
          %228 = sbr.rel (%p226) target = $region20
        $region19: #{tpu_custom_call.1} parent=11 // pred_region
          _
        $region20: #{tpu_custom_call.1} parent=11 // pred_fallthru
          _
        // Predicated region
        $region21: #{tpu_custom_call.1} parent=11 // pred_check
          %p229 = pneg %p119
        $region22: #{tpu_custom_call.1} parent=11 // pred_check_branch
          %231 = sbr.rel (%p229) target = $region24
        $region23: #{tpu_custom_call.1} parent=11 // pred_region
          _
        $region24: #{tpu_custom_call.1} parent=11 // pred_fallthru
          _
        // Predicated region
        $region25: #{tpu_custom_call.1} parent=11 // pred_check
          %p232 = pneg %p140
        $region26: #{tpu_custom_call.1} parent=11 // pred_check_branch
          %234 = sbr.rel (%p232) target = $region28
        $region27: #{tpu_custom_call.1} parent=11 // pred_region
          _
        $region28: #{tpu_custom_call.1} parent=11 // pred_fallthru
          _
        // Predicated region
        $region29: #{tpu_custom_call.1} parent=11 // pred_check
          %p235 = pneg %p161
        $region30: #{tpu_custom_call.1} parent=11 // pred_check_branch
          %237 = sbr.rel (%p235) target = $region32
        $region31: #{tpu_custom_call.1} parent=11 // pred_region
          _
        $region32: #{tpu_custom_call.1} parent=11 // pred_fallthru
          _
        // Predicated region
        $region33: #{tpu_custom_call.1} parent=11 // pred_check
          %p238 = pneg %p182
        $region34: #{tpu_custom_call.1} parent=11 // pred_check_branch
          %240 = sbr.rel (%p238) target = $region36
        $region35: #{tpu_custom_call.1} parent=11 // pred_region
          _
        $region36: #{tpu_custom_call.1} parent=11 // pred_fallthru
          _
      $region12: #{tpu_custom_call.1} parent=5 // pred_fallthru
        _
      %p241 = scmp.lt.s32.totalorder %s16, 2
      // Predicated region
      $region37: #{tpu_custom_call.1} parent=5 // pred_check
        %p242 = pneg %p241
      $region38: #{tpu_custom_call.1} parent=5 // pred_check_branch
        %244 = sbr.rel (%p242) target = $region40
      $region39: #{tpu_custom_call.1} parent=5 // pred_region
        // Predicated region
        $region41: #{tpu_custom_call.1} parent=39 // pred_check
          %p245 = pneg %p50
        $region42: #{tpu_custom_call.1} parent=39 // pred_check_branch
          %247 = sbr.rel (%p245) target = $region44
        $region43: #{tpu_custom_call.1} parent=39 // pred_region
          %s248 = smul.u32 2, %s24
          %p249 = scmp.lt.s32.totalorder %s23, 1
          %s250 = scalar_select %p249, %s23, 1
          %p251 = scmp.lt.s32.totalorder %s248, 1
          %s252 = scalar_select %p251, %s248, 1
          %s253 = smul.addr %s250, 2
          %s254 = sadd.s32 %s252, %s253
          %s255 = smul.addr %s254, 4
          %s256 = scalar_lea.vmem %s0, %s255
          %s257 = smul.u32 2, %s24
        $region44: #{tpu_custom_call.1} parent=39 // pred_fallthru
          _
      $region40: #{tpu_custom_call.1} parent=5 // pred_fallthru
        _
      %p258 = scmp.le.s32.totalorder 1, %s16
      %p259 = scmp.lt.s32.totalorder %s16, 3
      %p260 = pnand %p258, %p259
      %p261 = pneg %p260
      // Predicated region
      $region45: #{tpu_custom_call.1} parent=5 // pred_check
        _
      $region46: #{tpu_custom_call.1} parent=5 // pred_check_branch
        %263 = sbr.rel (%p260) target = $region48
      $region47: #{tpu_custom_call.1} parent=5 // pred_region
        %s264 = ssub.s32 %s16, 1
        %s265 = smul.u32 2, %s26
        %p266 = scmp.lt.s32.totalorder %s25, 1
        %s267 = scalar_select %p266, %s25, 1
        %p268 = scmp.lt.s32.totalorder %s265, 1
        %s269 = scalar_select %p268, %s265, 1
        %s270 = smul.addr %s267, 2
        %s271 = sadd.s32 %s269, %s270
        %s272 = smul.addr %s271, 4
        %s273 = scalar_lea.vmem %s0, %s272
        %p274 = pneg %p56
        %p275 = pneg %p53
        %p276 = pneg %p77
        %p277 = pneg %p74
        %p278 = pneg %p98
        %p279 = pneg %p95
        %p280 = pneg %p119
        %p281 = pneg %p116
        %p282 = pneg %p140
        %p283 = pneg %p137
        %p284 = pneg %p161
        %p285 = pneg %p158
        %p286 = pneg %p182
        %p287 = pneg %p179
        %p288 = pneg %p208
        %p289 = pneg %p205
        %s290 = sand.u32 %s195, 1
        %s291 = scalar_lea.sflag [#allocation4], %s290
        %s292 = sand.u32 %s195, 1
        %s293 = scalar_lea.vmem [#allocation3], %s292
        %s294 = smul.u32 2, %s26
        %p295 = scmp.lt.s32.totalorder %s25, 1
        %s296 = scalar_select %p295, %s25, 1
        %p297 = scmp.lt.s32.totalorder %s294, 1
        %s298 = scalar_select %p297, %s294, 1
        %s299 = smul.addr %s296, 2
        %s300 = sadd.s32 %s298, %s299
        %s301 = smul.addr %s300, 4
        %s302 = scalar_lea.vmem %s0, %s301
        %s303 = smul.u32 2, %s26
        %v305 = vld [vmem:[%s302] sm:$0x77]
        %v307 = vcombine.high %v305, %v305
        %v309 = vpack.c.bf16 %v305, %v305
        %v310 = vpack.c.bf16 %v307, %v307
        %v311 = vld [vmem:[%s1] sm:$0xf]
        %v312 = vld [vmem:[%s1 + $0x4] sm:$0xf]
        %v313 = vld [vmem:[%s1 + $0x8] sm:$0xf]
        %v314 = vld [vmem:[%s1 + $0xc] sm:$0xf]
        %v315 = vld [vmem:[%s2] sm:$0xff]
        %v316 = vld [vmem:[%s2 + $0x8] sm:$0xff]
        %v317 = vld [vmem:[%s2 + $0x10] sm:$0xff]
        %v318 = vld [vmem:[%s2 + $0x18] sm:$0xff]
        %320 = vset.pattern.permute.xlu0 0
        %321 = vperm.xlu0 %320, %v315
        %v322 = vpop.permute.xlu0 %321
        %325 = vset.pattern.permute.xlu0 0
        %326 = vperm.xlu0 %325, %v316
        %v327 = vpop.permute.xlu0 %326
        %330 = vset.pattern.permute.xlu0 0
        %331 = vperm.xlu0 %330, %v317
        %v332 = vpop.permute.xlu0 %331
        %335 = vset.pattern.permute.xlu0 0
        %336 = vperm.xlu0 %335, %v318
        %v337 = vpop.permute.xlu0 %336
        %v343 = vunpack.c.l.b16 %v311
        %v344 = vunpack.c.l.b16 %v312
        %v345 = vunpack.c.l.b16 %v313
        %v346 = vunpack.c.l.b16 %v314
        %v347 = vpack.c.b16 %v344, %v343
        %v348 = vpack.c.b16 %v346, %v345
        %vm349 = vcmask 23552
        %v351 = vsel %vm349, %v347, 0
        %v354 = vsel %vm349, %v348, 0
        %vm356 = vcmask 1040384
        %vm357 = vcmask 1041408
        %v358 = vsel %vm356, 4294967295, 65535
        %v359 = vsel %vm357, %v358, 0
        %v361 = vand.u32 %v309, %v359
        %v364 = vand.u32 %v310, %v359
        %366 = vmatprep.subr.bf16.mxu0 %v364
        %367 = vmatpush1.bf16.msra.mxu0 %v361
        %368 = vmatprep.subr.bf16.mxu0 0
        %369 = vmatpush1.bf16.msra.mxu0 0
        %370 = vmatprep.subr.bf16.mxu0 0
        %371 = vmatpush1.bf16.msra.mxu0 0
        %372 = vmatprep.subr.bf16.mxu0 0
        %373 = vmatpush1.bf16.msra.mxu0 0
        %374 = vmatprep.subr.bf16.mxu0 0
        %375 = vmatpush1.bf16.msra.mxu0 0
        %376 = vmatprep.subr.bf16.mxu0 0
        %377 = vmatpush1.bf16.msra.mxu0 0
        %378 = vmatprep.subr.bf16.mxu0 0
        %379 = vmatpush1.bf16.msra.mxu0 0
        %380 = vmatprep.subr.bf16.mxu0 0
        %381 = vmatpush1.bf16.msra.mxu0 0
        %382 = vmatprep.subr.bf16.mxu0 0
        %383 = vmatpush1.bf16.msra.mxu0 0
        %384 = vmatprep.subr.bf16.mxu0 0
        %385 = vmatpush1.bf16.msra.mxu0 0
        %386 = vmatprep.subr.bf16.mxu0 0
        %387 = vmatpush1.bf16.msra.mxu0 0
        %388 = vmatprep.subr.bf16.mxu0 0
        %389 = vmatpush1.bf16.msra.mxu0 0
        %390 = vmatprep.subr.bf16.mxu0 0
        %391 = vmatpush1.bf16.msra.mxu0 0
        %392 = vmatprep.subr.bf16.mxu0 0
        %393 = vmatpush1.bf16.msra.mxu0 0
        %394 = vmatprep.subr.bf16.mxu0 0
        %395 = vmatpush1.bf16.msra.mxu0 0
        %396 = vmatprep.subr.bf16.mxu0 0
        %397 = vmatpush1.bf16.msra.mxu0 0
        %398 = vmatprep.mubr.bf16.mxu0 0
        %399 = vmatmul.mubr.bf16.gmra.mrb[0].mxu0 %v351
        %v400 = vpop.f32.mrb[0].mxu0
        %v401 = vadd.f32 %v322, %v400
        %v402 = vpop.f32.mrb[0].mxu0
        %v403 = vadd.f32 %v322, %v402
        %v404 = vpop.f32.mrb[0].mxu0
        %v405 = vadd.f32 %v327, %v404
        %v406 = vpop.f32.mrb[0].mxu0
        %v407 = vadd.f32 %v327, %v406
        %408 = vmatprep.mubr.bf16.mxu0 0
        %409 = vmatmul.mubr.bf16.gmra.mrb[0].mxu0 %v354
        %v410 = vpop.f32.mrb[0].mxu0
        %v411 = vadd.f32 %v332, %v410
        %v412 = vpop.f32.mrb[0].mxu0
        %v413 = vadd.f32 %v332, %v412
        %v414 = vpop.f32.mrb[0].mxu0
        %v415 = vadd.f32 %v337, %v414
        %v416 = vpop.f32.mrb[0].mxu0
        %v417 = vadd.f32 %v337, %v416
        %418 = vdwg.mxu0
        %v419 = vmax.f32 %v401, 0.0
        %v420 = vmax.f32 %v403, 0.0
        %v421 = vmax.f32 %v405, 0.0
        %v422 = vmax.f32 %v407, 0.0
        %v423 = vmax.f32 %v411, 0.0
        %v424 = vmax.f32 %v413, 0.0
        %v425 = vmax.f32 %v415, 0.0
        %v426 = vmax.f32 %v417, 0.0
        %v427 = vpack.c.bf16 %v421, %v419
        %v428 = vpack.c.bf16 %v422, %v420
        %v429 = vpack.c.bf16 %v425, %v423
        %v430 = vpack.c.bf16 %v426, %v424
        %v431 = vld [vmem:[%s3] sm:$0xf]
        %v432 = vld [vmem:[%s3 + $0x4] sm:$0xf]
        %v433 = vld [vmem:[%s3 + $0x8] sm:$0xf]
        %v434 = vld [vmem:[%s3 + $0xc] sm:$0xf]
        %v435 = vld [vmem:[%s4] sm:$0xff]
        %v436 = vld [vmem:[%s4 + $0x8] sm:$0xff]
        %v437 = vld [vmem:[%s4 + $0x10] sm:$0xff]
        %v438 = vld [vmem:[%s4 + $0x18] sm:$0xff]
        %440 = vset.pattern.permute.xlu0 0
        %441 = vperm.xlu0 %440, %v435
        %v442 = vpop.permute.xlu0 %441
        %445 = vset.pattern.permute.xlu0 0
        %446 = vperm.xlu0 %445, %v436
        %v447 = vpop.permute.xlu0 %446
        %450 = vset.pattern.permute.xlu0 0
        %451 = vperm.xlu0 %450, %v437
        %v452 = vpop.permute.xlu0 %451
        %455 = vset.pattern.permute.xlu0 0
        %456 = vperm.xlu0 %455, %v438
        %v457 = vpop.permute.xlu0 %456
        %v463 = vunpack.c.l.b16 %v431
        %v464 = vunpack.c.l.b16 %v432
        %v465 = vunpack.c.l.b16 %v433
        %v466 = vunpack.c.l.b16 %v434
        %v467 = vpack.c.b16 %v464, %v463
        %v468 = vpack.c.b16 %v466, %v465
        %vm469 = vcmask 261120
        %v471 = vsel %vm469, %v467, 0
        %v474 = vsel %vm469, %v468, 0
        %476 = vmatprep.subr.bf16.mxu0 %v428
        %477 = vmatpush1.bf16.msra.mxu0 %v427
        %478 = vmatprep.subr.bf16.mxu0 %v430
        %479 = vmatpush1.bf16.msra.mxu0 %v429
        %480 = vmatprep.subr.bf16.mxu0 0
        %481 = vmatpush1.bf16.msra.mxu0 0
        %482 = vmatprep.subr.bf16.mxu0 0
        %483 = vmatpush1.bf16.msra.mxu0 0
        %484 = vmatprep.subr.bf16.mxu0 0
        %485 = vmatpush1.bf16.msra.mxu0 0
        %486 = vmatprep.subr.bf16.mxu0 0
        %487 = vmatpush1.bf16.msra.mxu0 0
        %488 = vmatprep.subr.bf16.mxu0 0
        %489 = vmatpush1.bf16.msra.mxu0 0
        %490 = vmatprep.subr.bf16.mxu0 0
        %491 = vmatpush1.bf16.msra.mxu0 0
        %492 = vmatprep.subr.bf16.mxu0 0
        %493 = vmatpush1.bf16.msra.mxu0 0
        %494 = vmatprep.subr.bf16.mxu0 0
        %495 = vmatpush1.bf16.msra.mxu0 0
        %496 = vmatprep.subr.bf16.mxu0 0
        %497 = vmatpush1.bf16.msra.mxu0 0
        %498 = vmatprep.subr.bf16.mxu0 0
        %499 = vmatpush1.bf16.msra.mxu0 0
        %500 = vmatprep.subr.bf16.mxu0 0
        %501 = vmatpush1.bf16.msra.mxu0 0
        %502 = vmatprep.subr.bf16.mxu0 0
        %503 = vmatpush1.bf16.msra.mxu0 0
        %504 = vmatprep.subr.bf16.mxu0 0
        %505 = vmatpush1.bf16.msra.mxu0 0
        %506 = vmatprep.subr.bf16.mxu0 0
        %507 = vmatpush1.bf16.msra.mxu0 0
        %508 = vmatprep.mubr.bf16.mxu0 0
        %509 = vmatmul.mubr.bf16.gmra.mrb[0].mxu0 %v471
        %v510 = vpop.f32.mrb[0].mxu0
        %v511 = vadd.f32 %v442, %v510
        %v512 = vpop.f32.mrb[0].mxu0
        %v513 = vadd.f32 %v442, %v512
        %v514 = vpop.f32.mrb[0].mxu0
        %v515 = vadd.f32 %v447, %v514
        %v516 = vpop.f32.mrb[0].mxu0
        %v517 = vadd.f32 %v447, %v516
        %518 = vmatprep.mubr.bf16.mxu0 0
        %519 = vmatmul.mubr.bf16.gmra.mrb[0].mxu0 %v474
        %v520 = vpop.f32.mrb[0].mxu0
        %v521 = vadd.f32 %v452, %v520
        %v522 = vpop.f32.mrb[0].mxu0
        %v523 = vadd.f32 %v452, %v522
        %v524 = vpop.f32.mrb[0].mxu0
        %v525 = vadd.f32 %v457, %v524
        %v526 = vpop.f32.mrb[0].mxu0
        %v527 = vadd.f32 %v457, %v526
        %528 = vdwg.mxu0
        %v529 = vmax.f32 %v511, 0.0
        %v530 = vmax.f32 %v513, 0.0
        %v531 = vmax.f32 %v515, 0.0
        %v532 = vmax.f32 %v517, 0.0
        %v533 = vmax.f32 %v521, 0.0
        %v534 = vmax.f32 %v523, 0.0
        %v535 = vmax.f32 %v525, 0.0
        %v536 = vmax.f32 %v527, 0.0
        %v537 = vpack.c.bf16 %v531, %v529
        %v538 = vpack.c.bf16 %v532, %v530
        %v539 = vpack.c.bf16 %v535, %v533
        %v540 = vpack.c.bf16 %v536, %v534
        %s541 = scalar_lea.vmem %s3, 16
        %v542 = vld [vmem:[%s541] sm:$0xf]
        %v543 = vld [vmem:[%s541 + $0x4] sm:$0xf]
        %v544 = vld [vmem:[%s541 + $0x8] sm:$0xf]
        %v545 = vld [vmem:[%s541 + $0xc] sm:$0xf]
        %s546 = scalar_lea.vmem %s4, 32
        %v547 = vld [vmem:[%s546] sm:$0xff]
        %v548 = vld [vmem:[%s546 + $0x8] sm:$0xff]
        %v549 = vld [vmem:[%s546 + $0x10] sm:$0xff]
        %v550 = vld [vmem:[%s546 + $0x18] sm:$0xff]
        %552 = vset.pattern.permute.xlu0 0
        %553 = vperm.xlu0 %552, %v547
        %v554 = vpop.permute.xlu0 %553
        %557 = vset.pattern.permute.xlu0 0
        %558 = vperm.xlu0 %557, %v548
        %v559 = vpop.permute.xlu0 %558
        %562 = vset.pattern.permute.xlu0 0
        %563 = vperm.xlu0 %562, %v549
        %v564 = vpop.permute.xlu0 %563
        %567 = vset.pattern.permute.xlu0 0
        %568 = vperm.xlu0 %567, %v550
        %v569 = vpop.permute.xlu0 %568
        %v575 = vunpack.c.l.b16 %v542
        %v576 = vunpack.c.l.b16 %v543
        %v577 = vunpack.c.l.b16 %v544
        %v578 = vunpack.c.l.b16 %v545
        %v579 = vpack.c.b16 %v576, %v575
        %v580 = vpack.c.b16 %v578, %v577
        %v582 = vsel %vm469, %v579, 0
        %v585 = vsel %vm469, %v580, 0
        %587 = vmatprep.subr.bf16.mxu0 %v538
        %588 = vmatpush1.bf16.msra.mxu0 %v537
        %589 = vmatprep.subr.bf16.mxu0 %v540
        %590 = vmatpush1.bf16.msra.mxu0 %v539
        %591 = vmatprep.subr.bf16.mxu0 0
        %592 = vmatpush1.bf16.msra.mxu0 0
        %593 = vmatprep.subr.bf16.mxu0 0
        %594 = vmatpush1.bf16.msra.mxu0 0
        %595 = vmatprep.subr.bf16.mxu0 0
        %596 = vmatpush1.bf16.msra.mxu0 0
        %597 = vmatprep.subr.bf16.mxu0 0
        %598 = vmatpush1.bf16.msra.mxu0 0
        %599 = vmatprep.subr.bf16.mxu0 0
        %600 = vmatpush1.bf16.msra.mxu0 0
        %601 = vmatprep.subr.bf16.mxu0 0
        %602 = vmatpush1.bf16.msra.mxu0 0
        %603 = vmatprep.subr.bf16.mxu0 0
        %604 = vmatpush1.bf16.msra.mxu0 0
        %605 = vmatprep.subr.bf16.mxu0 0
        %606 = vmatpush1.bf16.msra.mxu0 0
        %607 = vmatprep.subr.bf16.mxu0 0
        %608 = vmatpush1.bf16.msra.mxu0 0
        %609 = vmatprep.subr.bf16.mxu0 0
        %610 = vmatpush1.bf16.msra.mxu0 0
        %611 = vmatprep.subr.bf16.mxu0 0
        %612 = vmatpush1.bf16.msra.mxu0 0
        %613 = vmatprep.subr.bf16.mxu0 0
        %614 = vmatpush1.bf16.msra.mxu0 0
        %615 = vmatprep.subr.bf16.mxu0 0
        %616 = vmatpush1.bf16.msra.mxu0 0
        %617 = vmatprep.subr.bf16.mxu0 0
        %618 = vmatpush1.bf16.msra.mxu0 0
        %619 = vmatprep.mubr.bf16.mxu0 0
        %620 = vmatmul.mubr.bf16.gmra.mrb[0].mxu0 %v582
        %v621 = vpop.f32.mrb[0].mxu0
        %v622 = vadd.f32 %v554, %v621
        %v623 = vpop.f32.mrb[0].mxu0
        %v624 = vadd.f32 %v554, %v623
        %v625 = vpop.f32.mrb[0].mxu0
        %v626 = vadd.f32 %v559, %v625
        %v627 = vpop.f32.mrb[0].mxu0
        %v628 = vadd.f32 %v559, %v627
        %629 = vmatprep.mubr.bf16.mxu0 0
        %630 = vmatmul.mubr.bf16.gmra.mrb[0].mxu0 %v585
        %v631 = vpop.f32.mrb[0].mxu0
        %v632 = vadd.f32 %v564, %v631
        %v633 = vpop.f32.mrb[0].mxu0
        %v634 = vadd.f32 %v564, %v633
        %v635 = vpop.f32.mrb[0].mxu0
        %v636 = vadd.f32 %v569, %v635
        %v637 = vpop.f32.mrb[0].mxu0
        %v638 = vadd.f32 %v569, %v637
        %639 = vdwg.mxu0
        %v640 = vpack.c.bf16 %v626, %v622
        %v641 = vpack.c.bf16 %v628, %v624
        %v642 = vpack.c.bf16 %v636, %v632
        %v643 = vpack.c.bf16 %v638, %v634
        %s644 = scalar_lea.vmem %s3, 32
        %v645 = vld [vmem:[%s644] sm:$0xf]
        %v646 = vld [vmem:[%s644 + $0x4] sm:$0xf]
        %v647 = vld [vmem:[%s644 + $0x8] sm:$0xf]
        %v648 = vld [vmem:[%s644 + $0xc] sm:$0xf]
        %s649 = scalar_lea.vmem %s4, 64
        %v650 = vld [vmem:[%s649] sm:$0xff]
        %v651 = vld [vmem:[%s649 + $0x8] sm:$0xff]
        %v652 = vld [vmem:[%s649 + $0x10] sm:$0xff]
        %v653 = vld [vmem:[%s649 + $0x18] sm:$0xff]
        %655 = vset.pattern.permute.xlu0 0
        %656 = vperm.xlu0 %655, %v650
        %v657 = vpop.permute.xlu0 %656
        %660 = vset.pattern.permute.xlu0 0
        %661 = vperm.xlu0 %660, %v651
        %v662 = vpop.permute.xlu0 %661
        %665 = vset.pattern.permute.xlu0 0
        %666 = vperm.xlu0 %665, %v652
        %v667 = vpop.permute.xlu0 %666
        %670 = vset.pattern.permute.xlu0 0
        %671 = vperm.xlu0 %670, %v653
        %v672 = vpop.permute.xlu0 %671
        %v678 = vunpack.c.l.b16 %v645
        %v679 = vunpack.c.l.b16 %v646
        %v680 = vunpack.c.l.b16 %v647
        %v681 = vunpack.c.l.b16 %v648
        %v682 = vpack.c.b16 %v679, %v678
        %v683 = vpack.c.b16 %v681, %v680
        %v685 = vsel %vm469, %v682, 0
        %v688 = vsel %vm469, %v683, 0
        %690 = vmatprep.subr.bf16.mxu0 %v641
        %691 = vmatpush1.bf16.msra.mxu0 %v640
        %692 = vmatprep.subr.bf16.mxu0 %v643
        %693 = vmatpush1.bf16.msra.mxu0 %v642
        %694 = vmatprep.subr.bf16.mxu0 0
        %695 = vmatpush1.bf16.msra.mxu0 0
        %696 = vmatprep.subr.bf16.mxu0 0
        %697 = vmatpush1.bf16.msra.mxu0 0
        %698 = vmatprep.subr.bf16.mxu0 0
        %699 = vmatpush1.bf16.msra.mxu0 0
        %700 = vmatprep.subr.bf16.mxu0 0
        %701 = vmatpush1.bf16.msra.mxu0 0
        %702 = vmatprep.subr.bf16.mxu0 0
        %703 = vmatpush1.bf16.msra.mxu0 0
        %704 = vmatprep.subr.bf16.mxu0 0
        %705 = vmatpush1.bf16.msra.mxu0 0
        %706 = vmatprep.subr.bf16.mxu0 0
        %707 = vmatpush1.bf16.msra.mxu0 0
        %708 = vmatprep.subr.bf16.mxu0 0
        %709 = vmatpush1.bf16.msra.mxu0 0
        %710 = vmatprep.subr.bf16.mxu0 0
        %711 = vmatpush1.bf16.msra.mxu0 0
        %712 = vmatprep.subr.bf16.mxu0 0
        %713 = vmatpush1.bf16.msra.mxu0 0
        %714 = vmatprep.subr.bf16.mxu0 0
        %715 = vmatpush1.bf16.msra.mxu0 0
        %716 = vmatprep.subr.bf16.mxu0 0
        %717 = vmatpush1.bf16.msra.mxu0 0
        %718 = vmatprep.subr.bf16.mxu0 0
        %719 = vmatpush1.bf16.msra.mxu0 0
        %720 = vmatprep.subr.bf16.mxu0 0
        %721 = vmatpush1.bf16.msra.mxu0 0
        %722 = vmatprep.mubr.bf16.mxu0 0
        %723 = vmatmul.mubr.bf16.gmra.mrb[0].mxu0 %v685
        %v724 = vpop.f32.mrb[0].mxu0
        %v725 = vadd.f32 %v657, %v724
        %v726 = vpop.f32.mrb[0].mxu0
        %v727 = vadd.f32 %v657, %v726
        %v728 = vpop.f32.mrb[0].mxu0
        %v729 = vadd.f32 %v662, %v728
        %v730 = vpop.f32.mrb[0].mxu0
        %v731 = vadd.f32 %v662, %v730
        %732 = vmatprep.mubr.bf16.mxu0 0
        %733 = vmatmul.mubr.bf16.gmra.mrb[0].mxu0 %v688
        %v734 = vpop.f32.mrb[0].mxu0
        %v735 = vadd.f32 %v667, %v734
        %v736 = vpop.f32.mrb[0].mxu0
        %v737 = vadd.f32 %v667, %v736
        %v738 = vpop.f32.mrb[0].mxu0
        %v739 = vadd.f32 %v672, %v738
        %v740 = vpop.f32.mrb[0].mxu0
        %v741 = vadd.f32 %v672, %v740
        %742 = vdwg.mxu0
        %v743 = vmax.f32 %v725, 0.0
        %v744 = vmax.f32 %v727, 0.0
        %v745 = vmax.f32 %v729, 0.0
        %v746 = vmax.f32 %v731, 0.0
        %v747 = vmax.f32 %v735, 0.0
        %v748 = vmax.f32 %v737, 0.0
        %v749 = vmax.f32 %v739, 0.0
        %v750 = vmax.f32 %v741, 0.0
        %v751 = vpack.c.bf16 %v745, %v743
        %v752 = vpack.c.bf16 %v746, %v744
        %v753 = vpack.c.bf16 %v749, %v747
        %v754 = vpack.c.bf16 %v750, %v748
        %s755 = scalar_lea.vmem %s3, 48
        %v756 = vld [vmem:[%s755] sm:$0xf]
        %v757 = vld [vmem:[%s755 + $0x4] sm:$0xf]
        %v758 = vld [vmem:[%s755 + $0x8] sm:$0xf]
        %v759 = vld [vmem:[%s755 + $0xc] sm:$0xf]
        %s760 = scalar_lea.vmem %s4, 96
        %v761 = vld [vmem:[%s760] sm:$0xff]
        %v762 = vld [vmem:[%s760 + $0x8] sm:$0xff]
        %v763 = vld [vmem:[%s760 + $0x10] sm:$0xff]
        %v764 = vld [vmem:[%s760 + $0x18] sm:$0xff]
        %766 = vset.pattern.permute.xlu0 0
        %767 = vperm.xlu0 %766, %v761
        %v768 = vpop.permute.xlu0 %767
        %771 = vset.pattern.permute.xlu0 0
        %772 = vperm.xlu0 %771, %v762
        %v773 = vpop.permute.xlu0 %772
        %776 = vset.pattern.permute.xlu0 0
        %777 = vperm.xlu0 %776, %v763
        %v778 = vpop.permute.xlu0 %777
        %781 = vset.pattern.permute.xlu0 0
        %782 = vperm.xlu0 %781, %v764
        %v783 = vpop.permute.xlu0 %782
        %v789 = vunpack.c.l.b16 %v756
        %v790 = vunpack.c.l.b16 %v757
        %v791 = vunpack.c.l.b16 %v758
        %v792 = vunpack.c.l.b16 %v759
        %v793 = vpack.c.b16 %v790, %v789
        %v794 = vpack.c.b16 %v792, %v791
        %v796 = vsel %vm469, %v793, 0
        %v799 = vsel %vm469, %v794, 0
        %801 = vmatprep.subr.bf16.mxu0 %v752
        %802 = vmatpush1.bf16.msra.mxu0 %v751
        %803 = vmatprep.subr.bf16.mxu0 %v754
        %804 = vmatpush1.bf16.msra.mxu0 %v753
        %805 = vmatprep.subr.bf16.mxu0 0
        %806 = vmatpush1.bf16.msra.mxu0 0
        %807 = vmatprep.subr.bf16.mxu0 0
        %808 = vmatpush1.bf16.msra.mxu0 0
        %809 = vmatprep.subr.bf16.mxu0 0
        %810 = vmatpush1.bf16.msra.mxu0 0
        %811 = vmatprep.subr.bf16.mxu0 0
        %812 = vmatpush1.bf16.msra.mxu0 0
        %813 = vmatprep.subr.bf16.mxu0 0
        %814 = vmatpush1.bf16.msra.mxu0 0
        %815 = vmatprep.subr.bf16.mxu0 0
        %816 = vmatpush1.bf16.msra.mxu0 0
        %817 = vmatprep.subr.bf16.mxu0 0
        %818 = vmatpush1.bf16.msra.mxu0 0
        %819 = vmatprep.subr.bf16.mxu0 0
        %820 = vmatpush1.bf16.msra.mxu0 0
        %821 = vmatprep.subr.bf16.mxu0 0
        %822 = vmatpush1.bf16.msra.mxu0 0
        %823 = vmatprep.subr.bf16.mxu0 0
        %824 = vmatpush1.bf16.msra.mxu0 0
        %825 = vmatprep.subr.bf16.mxu0 0
        %826 = vmatpush1.bf16.msra.mxu0 0
        %827 = vmatprep.subr.bf16.mxu0 0
        %828 = vmatpush1.bf16.msra.mxu0 0
        %829 = vmatprep.subr.bf16.mxu0 0
        %830 = vmatpush1.bf16.msra.mxu0 0
        %831 = vmatprep.subr.bf16.mxu0 0
        %832 = vmatpush1.bf16.msra.mxu0 0
        %833 = vmatprep.mubr.bf16.mxu0 0
        %834 = vmatmul.mubr.bf16.gmra.mrb[0].mxu0 %v796
        %v835 = vpop.f32.mrb[0].mxu0
        %v836 = vadd.f32 %v768, %v835
        %v837 = vpop.f32.mrb[0].mxu0
        %v838 = vadd.f32 %v768, %v837
        %v839 = vpop.f32.mrb[0].mxu0
        %v840 = vadd.f32 %v773, %v839
        %v841 = vpop.f32.mrb[0].mxu0
        %v842 = vadd.f32 %v773, %v841
        %843 = vmatprep.mubr.bf16.mxu0 0
        %844 = vmatmul.mubr.bf16.gmra.mrb[0].mxu0 %v799
        %v845 = vpop.f32.mrb[0].mxu0
        %v846 = vadd.f32 %v778, %v845
        %v847 = vpop.f32.mrb[0].mxu0
        %v848 = vadd.f32 %v778, %v847
        %v849 = vpop.f32.mrb[0].mxu0
        %v850 = vadd.f32 %v783, %v849
        %v851 = vpop.f32.mrb[0].mxu0
        %v852 = vadd.f32 %v783, %v851
        %853 = vdwg.mxu0
        %v854 = vpack.c.bf16 %v840, %v836
        %v855 = vpack.c.bf16 %v842, %v838
        %v856 = vpack.c.bf16 %v850, %v846
        %v857 = vpack.c.bf16 %v852, %v848
        %s858 = scalar_lea.vmem %s3, 64
        %v859 = vld [vmem:[%s858] sm:$0xf]
        %v860 = vld [vmem:[%s858 + $0x4] sm:$0xf]
        %v861 = vld [vmem:[%s858 + $0x8] sm:$0xf]
        %v862 = vld [vmem:[%s858 + $0xc] sm:$0xf]
        %s863 = scalar_lea.vmem %s4, 128
        %v864 = vld [vmem:[%s863] sm:$0xff]
        %v865 = vld [vmem:[%s863 + $0x8] sm:$0xff]
        %v866 = vld [vmem:[%s863 + $0x10] sm:$0xff]
        %v867 = vld [vmem:[%s863 + $0x18] sm:$0xff]
        %869 = vset.pattern.permute.xlu0 0
        %870 = vperm.xlu0 %869, %v864
        %v871 = vpop.permute.xlu0 %870
        %874 = vset.pattern.permute.xlu0 0
        %875 = vperm.xlu0 %874, %v865
        %v876 = vpop.permute.xlu0 %875
        %879 = vset.pattern.permute.xlu0 0
        %880 = vperm.xlu0 %879, %v866
        %v881 = vpop.permute.xlu0 %880
        %884 = vset.pattern.permute.xlu0 0
        %885 = vperm.xlu0 %884, %v867
        %v886 = vpop.permute.xlu0 %885
        %v892 = vunpack.c.l.b16 %v859
        %v893 = vunpack.c.l.b16 %v860
        %v894 = vunpack.c.l.b16 %v861
        %v895 = vunpack.c.l.b16 %v862
        %v896 = vpack.c.b16 %v893, %v892
        %v897 = vpack.c.b16 %v895, %v894
        %v899 = vsel %vm469, %v896, 0
        %v902 = vsel %vm469, %v897, 0
        %904 = vmatprep.subr.bf16.mxu0 %v855
        %905 = vmatpush1.bf16.msra.mxu0 %v854
        %906 = vmatprep.subr.bf16.mxu0 %v857
        %907 = vmatpush1.bf16.msra.mxu0 %v856
        %908 = vmatprep.subr.bf16.mxu0 0
        %909 = vmatpush1.bf16.msra.mxu0 0
        %910 = vmatprep.subr.bf16.mxu0 0
        %911 = vmatpush1.bf16.msra.mxu0 0
        %912 = vmatprep.subr.bf16.mxu0 0
        %913 = vmatpush1.bf16.msra.mxu0 0
        %914 = vmatprep.subr.bf16.mxu0 0
        %915 = vmatpush1.bf16.msra.mxu0 0
        %916 = vmatprep.subr.bf16.mxu0 0
        %917 = vmatpush1.bf16.msra.mxu0 0
        %918 = vmatprep.subr.bf16.mxu0 0
        %919 = vmatpush1.bf16.msra.mxu0 0
        %920 = vmatprep.subr.bf16.mxu0 0
        %921 = vmatpush1.bf16.msra.mxu0 0
        %922 = vmatprep.subr.bf16.mxu0 0
        %923 = vmatpush1.bf16.msra.mxu0 0
        %924 = vmatprep.subr.bf16.mxu0 0
        %925 = vmatpush1.bf16.msra.mxu0 0
        %926 = vmatprep.subr.bf16.mxu0 0
        %927 = vmatpush1.bf16.msra.mxu0 0
        %928 = vmatprep.subr.bf16.mxu0 0
        %929 = vmatpush1.bf16.msra.mxu0 0
        %930 = vmatprep.subr.bf16.mxu0 0
        %931 = vmatpush1.bf16.msra.mxu0 0
        %932 = vmatprep.subr.bf16.mxu0 0
        %933 = vmatpush1.bf16.msra.mxu0 0
        %934 = vmatprep.subr.bf16.mxu0 0
        %935 = vmatpush1.bf16.msra.mxu0 0
        %936 = vmatprep.mubr.bf16.mxu0 0
        %937 = vmatmul.mubr.bf16.gmra.mrb[0].mxu0 %v899
        %v938 = vpop.f32.mrb[0].mxu0
        %v939 = vadd.f32 %v871, %v938
        %v940 = vpop.f32.mrb[0].mxu0
        %v941 = vadd.f32 %v871, %v940
        %v942 = vpop.f32.mrb[0].mxu0
        %v943 = vadd.f32 %v876, %v942
        %v944 = vpop.f32.mrb[0].mxu0
        %v945 = vadd.f32 %v876, %v944
        %946 = vmatprep.mubr.bf16.mxu0 0
        %947 = vmatmul.mubr.bf16.gmra.mrb[0].mxu0 %v902
        %v948 = vpop.f32.mrb[0].mxu0
        %v949 = vadd.f32 %v881, %v948
        %v950 = vpop.f32.mrb[0].mxu0
        %v951 = vadd.f32 %v881, %v950
        %v952 = vpop.f32.mrb[0].mxu0
        %v953 = vadd.f32 %v886, %v952
        %v954 = vpop.f32.mrb[0].mxu0
        %v955 = vadd.f32 %v886, %v954
        %956 = vdwg.mxu0
        %v957 = vmax.f32 %v939, 0.0
        %v958 = vmax.f32 %v941, 0.0
        %v959 = vmax.f32 %v943, 0.0
        %v960 = vmax.f32 %v945, 0.0
        %v961 = vmax.f32 %v949, 0.0
        %v962 = vmax.f32 %v951, 0.0
        %v963 = vmax.f32 %v953, 0.0
        %v964 = vmax.f32 %v955, 0.0
        %p965 = scmp.eq.s32.totalorder %s26, 0
        // Predicated region
        $region49: #{tpu_custom_call.1} parent=47 // pred_check
          %p966 = pneg %p965
        $region50: #{tpu_custom_call.1} parent=47 // pred_check_branch
          %968 = sbr.rel (%p966) target = $region52
        $region51: #{tpu_custom_call.1} parent=47 // pred_region
          %vm969 = vcmask 7168
          %970 = vst.msk [vmem:[#allocation2] sm:$0xff] %vm969, 0.0
          %971 = vst.msk [vmem:[#allocation2 + $0x8] sm:$0xff] %vm969, 0.0
          %972 = vst.msk [vmem:[#allocation2 + $0x10] sm:$0xff] %vm969, 0.0
          %973 = vst.msk [vmem:[#allocation2 + $0x18] sm:$0xff] %vm969, 0.0
        $region52: #{tpu_custom_call.1} parent=47 // pred_fallthru
          _
        %v974 = vld [vmem:[#allocation2] sm:$0xff]
        %v975 = vld [vmem:[#allocation2 + $0x8] sm:$0xff]
        %v976 = vld [vmem:[#allocation2 + $0x10] sm:$0xff]
        %v977 = vld [vmem:[#allocation2 + $0x18] sm:$0xff]
        %v978 = vadd.f32 %v957, %v958
        %979 = vadd.xlane.f32.xlu0 %v978
        %v980 = vpop.xlane.xlu0 %979
        %v981 = vadd.f32 %v959, %v960
        %982 = vadd.xlane.f32.xlu0 %v981
        %v983 = vpop.xlane.xlu0 %982
        %v984 = vadd.f32 %v961, %v962
        %985 = vadd.xlane.f32.xlu0 %v984
        %v986 = vpop.xlane.xlu0 %985
        %v987 = vadd.f32 %v963, %v964
        %988 = vadd.xlane.f32.xlu0 %v987
        %v989 = vpop.xlane.xlu0 %988
        %v990 = vadd.f32 %v974, %v980
        %v991 = vadd.f32 %v975, %v983
        %v992 = vadd.f32 %v976, %v986
        %v993 = vadd.f32 %v977, %v989
        %vm994 = vcmask 7168
        %995 = vst.msk [vmem:[#allocation2] sm:$0xff] %vm994, %v990
        %996 = vst.msk [vmem:[#allocation2 + $0x8] sm:$0xff] %vm994, %v991
        %997 = vst.msk [vmem:[#allocation2 + $0x10] sm:$0xff] %vm994, %v992
        %998 = vst.msk [vmem:[#allocation2 + $0x18] sm:$0xff] %vm994, %v993
        // Predicated region
        $region53: #{tpu_custom_call.1} parent=47 // pred_check
          %p999 = pneg %p965
        $region54: #{tpu_custom_call.1} parent=47 // pred_check_branch
          %1001 = sbr.rel (%p999) target = $region56
        $region55: #{tpu_custom_call.1} parent=47 // pred_region
          %v1002 = vld [vmem:[#allocation2] sm:$0xff]
          %v1003 = vld [vmem:[#allocation2 + $0x8] sm:$0xff]
          %v1004 = vld [vmem:[#allocation2 + $0x10] sm:$0xff]
          %v1005 = vld [vmem:[#allocation2 + $0x18] sm:$0xff]
          %v1006 = vmul.f32 %v1002, 0.00390625
          %v1007 = vmul.f32 %v1003, 0.00390625
          %v1008 = vmul.f32 %v1004, 0.00390625
          %v1009 = vmul.f32 %v1005, 0.00390625
          %v1010 = vld [vmem:[%s5] sm:$0xff]
          %v1011 = vld [vmem:[%s5 + $0x8] sm:$0xff]
          %v1012 = vld [vmem:[%s5 + $0x10] sm:$0xff]
          %v1013 = vld [vmem:[%s5 + $0x18] sm:$0xff]
          %v1014 = vld [vmem:[%s6] sm:$0x1]
          %1015 = vxpose.xlu0.b32.start [1/16] %v1006, 128
          %1016 = vxpose.xlu0.b32.cont [2/16] %v1007, 128
          %1017 = vxpose.xlu0.b32.cont [3/16] %v1008, 128
          %1018 = vxpose.xlu0.b32.cont [4/16] %v1009, 128
          %1019 = vxpose.xlu0.b32.cont [5/16] 0.0, 128
          %1020 = vxpose.xlu0.b32.cont [6/16] 0.0, 128
          %1021 = vxpose.xlu0.b32.cont [7/16] 0.0, 128
          %1022 = vxpose.xlu0.b32.cont [8/16] 0.0, 128
          %1023 = vxpose.xlu0.b32.cont [9/16] 0.0, 128
          %1024 = vxpose.xlu0.b32.cont [10/16] 0.0, 128
          %1025 = vxpose.xlu0.b32.cont [11/16] 0.0, 128
          %1026 = vxpose.xlu0.b32.cont [12/16] 0.0, 128
          %1027 = vxpose.xlu0.b32.cont [13/16] 0.0, 128
          %1028 = vxpose.xlu0.b32.cont [14/16] 0.0, 128
          %1029 = vxpose.xlu0.b32.cont [15/16] 0.0, 128
          %1030 = vxpose.xlu0.b32.end [16/16] 0.0, 128
          %v1031 = vpop.trf.xlu0
          %v1032 = vpop.trf.xlu0
          %v1033 = vpop.trf.xlu0
          %v1034 = vpop.trf.xlu0
          %v1035 = vpop.trf.xlu0
          %v1036 = vpop.trf.xlu0
          %v1037 = vpop.trf.xlu0
          %v1038 = vpop.trf.xlu0
          %v1039 = vpop.trf.xlu0
          %v1040 = vpop.trf.xlu0
          %v1041 = vpop.trf.xlu0
          %v1042 = vpop.trf.xlu0
          %v1043 = vpop.trf.xlu0
          %v1044 = vpop.trf.xlu0
          %v1045 = vpop.trf.xlu0
          %v1046 = vpop.trf.xlu0
          %v1048 = vsel %vm469, %v1031, 0
          %1050 = vmatprep.subr.mxu0 0.0
          %1051 = vmatpush1.msra.mxu0 %v1010
          %1052 = vmatprep.subr.mxu0 0.0
          %1053 = vmatpush1.msra.mxu0 %v1011
          %1054 = vmatprep.subr.mxu0 0.0
          %1055 = vmatpush1.msra.mxu0 %v1012
          %1056 = vmatprep.subr.mxu0 0.0
          %1057 = vmatpush1.msra.mxu0 %v1013
          %1058 = vmatprep.subr.mxu0 0.0
          %1059 = vmatpush1.msra.mxu0 0.0
          %1060 = vmatprep.subr.mxu0 0.0
          %1061 = vmatpush1.msra.mxu0 0.0
          %1062 = vmatprep.subr.mxu0 0.0
          %1063 = vmatpush1.msra.mxu0 0.0
          %1064 = vmatprep.subr.mxu0 0.0
          %1065 = vmatpush1.msra.mxu0 0.0
          %1066 = vmatprep.subr.mxu0 0.0
          %1067 = vmatpush1.msra.mxu0 0.0
          %1068 = vmatprep.subr.mxu0 0.0
          %1069 = vmatpush1.msra.mxu0 0.0
          %1070 = vmatprep.subr.mxu0 0.0
          %1071 = vmatpush1.msra.mxu0 0.0
          %1072 = vmatprep.subr.mxu0 0.0
          %1073 = vmatpush1.msra.mxu0 0.0
          %1074 = vmatprep.subr.mxu0 0.0
          %1075 = vmatpush1.msra.mxu0 0.0
          %1076 = vmatprep.subr.mxu0 0.0
          %1077 = vmatpush1.msra.mxu0 0.0
          %1078 = vmatprep.subr.mxu0 0.0
          %1079 = vmatpush1.msra.mxu0 0.0
          %1080 = vmatprep.subr.mxu0 0.0
          %1081 = vmatpush1.msra.mxu0 0.0
          %1082 = vmatprep.subr.mxu0 0.0
          %1083 = vmatpush1.msra.mxu0 0.0
          %1084 = vmatprep.subr.mxu0 0.0
          %1085 = vmatpush1.msra.mxu0 0.0
          %1086 = vmatprep.subr.mxu0 0.0
          %1087 = vmatpush1.msra.mxu0 0.0
          %1088 = vmatprep.subr.mxu0 0.0
          %1089 = vmatpush1.msra.mxu0 0.0
          %1090 = vmatprep.subr.mxu0 0.0
          %1091 = vmatpush1.msra.mxu0 0.0
          %1092 = vmatprep.subr.mxu0 0.0
          %1093 = vmatpush1.msra.mxu0 0.0
          %1094 = vmatprep.subr.mxu0 0.0
          %1095 = vmatpush1.msra.mxu0 0.0
          %1096 = vmatprep.subr.mxu0 0.0
          %1097 = vmatpush1.msra.mxu0 0.0
          %1098 = vmatprep.subr.mxu0 0.0
          %1099 = vmatpush1.msra.mxu0 0.0
          %1100 = vmatprep.subr.mxu0 0.0
          %1101 = vmatpush1.msra.mxu0 0.0
          %1102 = vmatprep.subr.mxu0 0.0
          %1103 = vmatpush1.msra.mxu0 0.0
          %1104 = vmatprep.subr.mxu0 0.0
          %1105 = vmatpush1.msra.mxu0 0.0
          %1106 = vmatprep.subr.mxu0 0.0
          %1107 = vmatpush1.msra.mxu0 0.0
          %1108 = vmatprep.subr.mxu0 0.0
          %1109 = vmatpush1.msra.mxu0 0.0
          %1110 = vmatprep.subr.mxu0 0.0
          %1111 = vmatpush1.msra.mxu0 0.0
          %1112 = vmatprep.subr.mxu0 0.0
          %1113 = vmatpush1.msra.mxu0 0.0
          %1114 = vmatprep.mubr.f32.mxu0 0.0
          %1115 = vmatmul.mubr.f32.gmra.mrb[0].mxu0 %v1048
          %v1116 = vpop.f32.mrb[0].mxu0
          %v1117 = vadd.f32 %v1014, %v1116
          %v1118 = vpop.f32.mrb[0].mxu0
          %1119 = vdwg.mxu0
          %vm1120 = vcmask 73728
          %1121 = vst.msk [vmem:[%s293] sm:$0x1] %vm1120, %v1117
        $region56: #{tpu_custom_call.1} parent=47 // pred_fallthru
          _
        %s1122 = sand.u32 %s195, 1
        %s1123 = scalar_lea.sflag [#allocation4], %s1122
        %s1124 = sand.u32 %s195, 1
        %s1125 = scalar_lea.vmem [#allocation3], %s1124
        // Predicated region
        $region57: #{tpu_custom_call.1} parent=47 // pred_check
          %p1126 = pneg %p205
        $region58: #{tpu_custom_call.1} parent=47 // pred_check_branch
          %1128 = sbr.rel (%p1126) target = $region60
        $region59: #{tpu_custom_call.1} parent=47 // pred_region
          %s1130 = ssub.s32 16, 16
          %1131 = vsyncadd %s1123, %s1130
          %s1132 = smul.addr %s25, 16
          %s1133 = scalar_lea.hbm %s7, %s1132
          %s1135 = sshll.u32 %s1125, 4
          %s1136 = int_to_ptr.vmem [resolvable:$true] %s1135
          %1138 = dma.vmem_to_hbm [thread:$0]  %s1136, 16, %s1133, %s1123
        $region60: #{tpu_custom_call.1} parent=47 // pred_fallthru
          _
      $region48: #{tpu_custom_call.1} parent=5 // pred_fallthru
        _
      %p1139 = scmp.le.s32.totalorder 2, %s16
      // Predicated region
      $region61: #{tpu_custom_call.1} parent=5 // pred_check
        %p1140 = pneg %p1139
      $region62: #{tpu_custom_call.1} parent=5 // pred_check_branch
        %1142 = sbr.rel (%p1140) target = $region64
      $region63: #{tpu_custom_call.1} parent=5 // pred_region
        %s1143 = ssub.s32 %s16, 2
        // Predicated region
        $region65: #{tpu_custom_call.1} parent=63 // pred_check
          %p1144 = pneg %p211
        $region66: #{tpu_custom_call.1} parent=63 // pred_check_branch
          %1146 = sbr.rel (%p1144) target = $region68
        $region67: #{tpu_custom_call.1} parent=63 // pred_region
          %s1147 = sand.u32 %s196, 1
          %s1148 = scalar_lea.sflag [#allocation4], %s1147
          %s1149 = sand.u32 %s196, 1
          %s1150 = scalar_lea.vmem [#allocation3], %s1149
          %1151 = dma.done %s1148, 16
        $region68: #{tpu_custom_call.1} parent=63 // pred_fallthru
          _
      $region64: #{tpu_custom_call.1} parent=5 // pred_fallthru
        _
    $region6: #{tpu_custom_call.1} parent=1 // loop_footer
      %s20 = sadd.s32 1, %s16
    $region7: #{tpu_custom_call.1} parent=1 // loop_footer_branch
      %15 = sbr.rel target = $region3
    $region8: #{tpu_custom_call.1} parent=1 // loop_exit
      _
    %1152 = vsyncpa [#allocation4], 1
    %s1153 = scalar_lea.sflag [#allocation4], 1
    %1154 = vsyncpa %s1153, 1

</llo_original>
